<compile_context>
chip_gen: v7x
topology: tpu7x:2x2x1
jax: 0.10.0
libtpu: 0.0.40
codegen_flags: <defaults>
</compile_context>

<pallas_src>
import functools

import jax
import jax.numpy as jnp
from jax.experimental import pallas as pl
from jax.experimental.pallas import tpu as pltpu


def _skipgram_loss_kernel(center_ref, others_ref, loss_ref, *, inv_batch):
    # center_ref: (tile_b, Dp)       f32   in_emb[center]
    # others_ref: (tile_b, K+1, Dp)  f32   [out_emb[context], out_emb[neg_0..K-1]]
    # loss_ref:   (1, 1) SMEM        f32   scalar loss accumulator / output
    i = pl.program_id(0)

    @pl.when(i == 0)
    def _init():
        loss_ref[0, 0] = jnp.float32(0.0)

    ce = center_ref[...]                                   # (tb, Dp)
    oth = others_ref[...]                                  # (tb, K+1, Dp)

    # score[b, j] = center_b . others_{b, j}
    # VPU multiply with an in-VMEM sublane broadcast of the center row
    # (replaces the K-times duplicated HBM stream) + XLU lane reduce.
    scores = jnp.sum(ce[:, None, :] * oth, axis=-1)        # (tb, K+1)

    # Column 0 is the positive (context) pair -> +score; columns 1..K are the
    # negatives -> -score.
    col = jax.lax.broadcasted_iota(jnp.int32, scores.shape, 1)
    x = jnp.where(col == 0, scores, -scores)

    # Numerically stable log(sigmoid(x)) = min(x, 0) - log(1 + exp(-|x|)).
    # (log1p would be marginally more precise, but log/exp are the
    #  guaranteed-lowering EUP path; the difference is far below f32 loss noise.)
    log_sig = jnp.minimum(x, 0.0) - jnp.log(1.0 + jnp.exp(-jnp.abs(x)))

    # Partial sum of this batch tile, accumulated into the SMEM scalar.
    loss_ref[0, 0] += jnp.sum(log_sig)

    @pl.when(i == pl.num_programs(0) - 1)
    def _finalize():
        loss_ref[0, 0] = -loss_ref[0, 0] * jnp.float32(inv_batch)


def _pick_tile_b(batch, max_tile=512):
    """Batch tile: whole batch if small (single step), else an 8-aligned divisor."""
    if batch <= max_tile:
        return batch
    for t in range(max_tile - max_tile % 8, 7, -8):
        if batch % t == 0:
            return t
    return batch


@jax.jit
def skip_gram_loss(in_emb, out_emb, center_words, context_words, negative_words):
    """Forward pass of SkipGramModel: returns the scalar negative-sampling loss."""
    (B,) = center_words.shape
    _, K = negative_words.shape
    _, D = in_emb.shape
    Dp = ((D + 127) // 128) * 128

    # Tables should already be lane-padded once at init; this (trace-time)
    # branch only fires if an unpadded table is passed.
    if Dp != D:
        in_emb = jnp.pad(in_emb, ((0, 0), (0, Dp - D)))
        out_emb = jnp.pad(out_emb, ((0, 0), (0, Dp - D)))

    # nn.Embedding gathers, fused into this jit.  Zero pad lanes in BOTH
    # operands leave every dot product unchanged.
    ce = in_emb[center_words].astype(jnp.float32)               # (B, Dp)
    co = out_emb[context_words].astype(jnp.float32)             # (B, Dp)
    ne = out_emb[negative_words].astype(jnp.float32)            # (B, K, Dp)
    # Fused slab: within each batch group, row 0 = context, rows 1..K = negatives.
    others = jnp.concatenate([co[:, None, :], ne], axis=1)      # (B, K+1, Dp)

    tile_b = _pick_tile_b(B)
    grid = (B // tile_b,)

    loss = pl.pallas_call(
        functools.partial(_skipgram_loss_kernel, inv_batch=1.0 / B),
        out_shape=jax.ShapeDtypeStruct((1, 1), jnp.float32),
        grid=grid,
        in_specs=[
            pl.BlockSpec((tile_b, Dp), lambda i: (i, 0)),
            pl.BlockSpec((tile_b, K + 1, Dp), lambda i: (i, 0, 0)),
        ],
        # Scalar loss lives in (and is emitted from) SMEM; constant block index
        # keeps it resident across the whole grid.
        out_specs=pl.BlockSpec((1, 1), lambda i: (0, 0),
                               memory_space=pltpu.MemorySpace.SMEM),
        # The batch-tile axis accumulates into the same output block, so it is
        # a reduction axis ("arbitrary", not "parallel").
        compiler_params=pltpu.CompilerParams(
            dimension_semantics=("arbitrary",)),
    )(ce, others)
    return loss[0, 0]


def skip_gram_loss_ref(in_emb, out_emb, center, context, negative):
    """Pure-JAX reference mirroring the PyTorch forward."""
    ce = in_emb[center]                                              # (B, D)
    co = out_emb[context]                                            # (B, D)
    ne = out_emb[negative]                                           # (B, K, D)
    pos_score = jnp.sum(ce * co, axis=1)                             # (B,)
    pos_loss = jnp.log(jax.nn.sigmoid(pos_score))                    # (B,)
    neg_score = jnp.einsum("bkd,bd->bk", ne, ce)                     # (B, K) == bmm+squeeze
    neg_loss = jnp.sum(jnp.log(jax.nn.sigmoid(-neg_score)), axis=1)  # (B,)
    return -jnp.mean(pos_loss + neg_loss)


if __name__ == "__main__":
    vocab_size = 50
    embedding_dim = 100      # matches the module's embedding_dim
    B, K = 8, 5              # batch of 8 center/context pairs, 5 negatives each

    key = jax.random.PRNGKey(0)
    k1, k2, k3, k4, k5 = jax.random.split(key, 5)
    # nn.Embedding default init is N(0, 1)
    in_emb = jax.random.normal(k1, (vocab_size, embedding_dim), jnp.float32)
    out_emb = jax.random.normal(k2, (vocab_size, embedding_dim), jnp.float32)
    center_words = jax.random.randint(k3, (B,), 0, vocab_size, jnp.int32)
    context_words = jax.random.randint(k4, (B,), 0, vocab_size, jnp.int32)
    negative_words = jax.random.randint(k5, (B, K), 0, vocab_size, jnp.int32)

    # Pad the tables to the 128-lane width ONCE at init (zeroed pad lanes keep
    # every dot product identical).
    Dp = ((embedding_dim + 127) // 128) * 128
    in_emb_p = jnp.pad(in_emb, ((0, 0), (0, Dp - embedding_dim)))
    out_emb_p = jnp.pad(out_emb, ((0, 0), (0, Dp - embedding_dim)))

    loss = skip_gram_loss(in_emb_p, out_emb_p,
                          center_words, context_words, negative_words)
    loss = jax.block_until_ready(loss)

    ref = skip_gram_loss_ref(in_emb, out_emb,
                             center_words, context_words, negative_words)
    assert jnp.allclose(loss, ref, atol=1e-4, rtol=1e-4), (loss, ref)

    print("KERNEL_OK")
</pallas_src>

<mosaic_0001>
module attributes {stable_mosaic.version = 11 : i64} {
  func.func @_skipgram_loss_kernel(%arg0: i32, %arg1: memref<8x128xf32, #tpu.memory_space<vmem>>, %arg2: memref<8x6x128xf32, #tpu.memory_space<vmem>>, %arg3: memref<1x1xf32, #tpu.memory_space<smem>>) attributes {dimension_semantics = [#tpu.dimension_semantics<arbitrary>], iteration_bounds = array<i64: 1>, scalar_prefetch = 0 : i64, scratch_operands = 0 : i64, tpu.core_type = #tpu.core_type<tc>, window_params = [{transform_indices = @transform_0, window_bounds = array<i64: 8, 128>}, {transform_indices = @transform_1, window_bounds = array<i64: 8, 6, 128>}, {transform_indices = @transform_2, window_bounds = array<i64: 1, 1>}]} {
    %c0_i32 = arith.constant 0 : i32
    %0 = arith.cmpi eq, %arg0, %c0_i32 : i32
    %1 = arith.extui %0 : i1 to i32
    %c0_i32_0 = arith.constant 0 : i32
    %2 = arith.cmpi ne, %1, %c0_i32_0 : i32
    scf.if %2 {
      %cst_17 = arith.constant 0.000000e+00 : f32
      %c0_18 = arith.constant 0 : index
      %c0_19 = arith.constant 0 : index
      %35 = memref.load %arg3[%c0_18, %c0_19] : memref<1x1xf32, #tpu.memory_space<smem>>
      memref.store %cst_17, %arg3[%c0_18, %c0_19] : memref<1x1xf32, #tpu.memory_space<smem>>
    } else {
    }
    %c0 = arith.constant 0 : index
    %c0_1 = arith.constant 0 : index
    %3 = vector.load %arg1[%c0, %c0_1] : memref<8x128xf32, #tpu.memory_space<vmem>>, vector<8x128xf32>
    %c0_2 = arith.constant 0 : index
    %c0_3 = arith.constant 0 : index
    %c0_4 = arith.constant 0 : index
    %4 = vector.load %arg2[%c0_2, %c0_3, %c0_4] : memref<8x6x128xf32, #tpu.memory_space<vmem>>, vector<8x6x128xf32>
    %5 = vector.shape_cast %3 : vector<8x128xf32> to vector<8x1x128xf32>
    %6 = vector.broadcast %5 : vector<8x1x128xf32> to vector<8x6x128xf32>
    %7 = arith.mulf %6, %4 : vector<8x6x128xf32>
    %cst = arith.constant dense<0.000000e+00> : vector<8x6xf32>
    %8 = vector.multi_reduction <add>, %7, %cst [2] : vector<8x6x128xf32> to vector<8x6xf32>
    %9 = tpu.iota {dimensions = array<i32: 1>} : vector<8x6xi32>
    %c0_i32_5 = arith.constant 0 : i32
    %10 = vector.broadcast %c0_i32_5 : i32 to vector<8x6xi32>
    %11 = arith.cmpi eq, %9, %10 : vector<8x6xi32>
    %cst_6 = arith.constant 0.000000e+00 : f32
    %12 = vector.broadcast %cst_6 : f32 to vector<8x6xf32>
    %13 = arith.subf %12, %8 : vector<8x6xf32>
    %14 = arith.select %11, %8, %13 : vector<8x6xi1>, vector<8x6xf32>
    %cst_7 = arith.constant 0.000000e+00 : f32
    %15 = vector.broadcast %cst_7 : f32 to vector<8x6xf32>
    %16 = arith.minimumf %14, %15 : vector<8x6xf32>
    %17 = math.absf %14 : vector<8x6xf32>
    %cst_8 = arith.constant 0.000000e+00 : f32
    %18 = vector.broadcast %cst_8 : f32 to vector<8x6xf32>
    %19 = arith.subf %18, %17 : vector<8x6xf32>
    %20 = math.exp %19 : vector<8x6xf32>
    %cst_9 = arith.constant 1.000000e+00 : f32
    %21 = vector.broadcast %cst_9 : f32 to vector<8x6xf32>
    %22 = arith.addf %21, %20 : vector<8x6xf32>
    %23 = math.log %22 : vector<8x6xf32>
    %24 = arith.subf %16, %23 : vector<8x6xf32>
    %c0_10 = arith.constant 0 : index
    %c0_11 = arith.constant 0 : index
    %25 = memref.load %arg3[%c0_10, %c0_11] : memref<1x1xf32, #tpu.memory_space<smem>>
    %26 = vector.shape_cast %24 : vector<8x6xf32> to vector<1x8x6xf32>
    %cst_12 = arith.constant dense<0.000000e+00> : vector<1xf32>
    %27 = vector.multi_reduction <add>, %26, %cst_12 [1, 2] : vector<1x8x6xf32> to vector<1xf32>
    %28 = vector.shape_cast %27 : vector<1xf32> to vector<1x1x1xf32>
    %29 = vector.extract %28[0, 0, 0] : f32 from vector<1x1x1xf32>
    %30 = arith.addf %25, %29 : f32
    %c0_13 = arith.constant 0 : index
    %c0_14 = arith.constant 0 : index
    %31 = memref.load %arg3[%c0_13, %c0_14] : memref<1x1xf32, #tpu.memory_space<smem>>
    memref.store %30, %arg3[%c0_13, %c0_14] : memref<1x1xf32, #tpu.memory_space<smem>>
    %c0_i32_15 = arith.constant 0 : i32
    %32 = arith.cmpi eq, %arg0, %c0_i32_15 : i32
    %33 = arith.extui %32 : i1 to i32
    %c0_i32_16 = arith.constant 0 : i32
    %34 = arith.cmpi ne, %33, %c0_i32_16 : i32
    scf.if %34 {
      %c0_17 = arith.constant 0 : index
      %c0_18 = arith.constant 0 : index
      %35 = memref.load %arg3[%c0_17, %c0_18] : memref<1x1xf32, #tpu.memory_space<smem>>
      %cst_19 = arith.constant 0.000000e+00 : f32
      %36 = arith.subf %cst_19, %35 : f32
      %cst_20 = arith.constant 1.250000e-01 : f32
      %37 = arith.mulf %36, %cst_20 : f32
      %c0_21 = arith.constant 0 : index
      %c0_22 = arith.constant 0 : index
      %38 = memref.load %arg3[%c0_21, %c0_22] : memref<1x1xf32, #tpu.memory_space<smem>>
      memref.store %37, %arg3[%c0_21, %c0_22] : memref<1x1xf32, #tpu.memory_space<smem>>
    } else {
    }
    return
  }
  func.func @transform_0(%arg0: i32) -> (i32, i32) {
    %c0_i32 = arith.constant 0 : i32
    %c0_i32_0 = arith.constant 0 : i32
    return %arg0, %c0_i32 : i32, i32
  }
  func.func @transform_1(%arg0: i32) -> (i32, i32, i32) {
    %c0_i32 = arith.constant 0 : i32
    %c0_i32_0 = arith.constant 0 : i32
    %c0_i32_1 = arith.constant 0 : i32
    return %arg0, %c0_i32, %c0_i32_0 : i32, i32, i32
  }
  func.func @transform_2(%arg0: i32) -> (i32, i32) {
    %c0_i32 = arith.constant 0 : i32
    %c0_i32_0 = arith.constant 0 : i32
    %c0_i32_1 = arith.constant 0 : i32
    return %c0_i32, %c0_i32_0 : i32, i32
  }
}

</mosaic_0001>

<llo_original>
// kernel: skip_gram_loss.1
$region0: #{skip_gram_loss.1}
  #allocation0 [shape = 'u32[]', space=smem, size = 0x4, offset = 0x4, fixed_abs, tag = 'smem constant byte address 0x4 - core index']
  #allocation1 [shape = 'u32[144,128]{1,0:T(1,128)}', space=vmem, size = 0x12000, scoped, tag = 'internal scratch']
  %s0 = inlined_call_operand.vmem [shape: f32[8,128], index: 0, kind: input, shape index: {}]
  %s1 = inlined_call_operand.vmem [shape: f32[8,6,128], index: 1, kind: input, shape index: {}]
  %s2 = inlined_call_operand.hbm [shape: f32[1,1], index: 2, kind: output, shape index: {}]
  %s3 = sld [smem:[#allocation0]]
  $region26: #{skip_gram_loss.1} parent=0
    _
  %s5 = ssub.s32 1, %s3
  %s6 = scalar_select 0, %s5, %s3
  $region1: #{skip_gram_loss.1} parent=0
    #allocation2 [shape = 'u8[512]{0}', space=smem, size = 0x200, scoped, tag = 'output window, operand 0, single buffered']
    #allocation3 [shape = 's32[1]{0}', space=sflag, size = 0x4, scoped, tag = 'scoped memory for skip_gram_loss.1']
    %7 = vsyncpa [#allocation3], 0
    // Predicated region
    $region2: #{skip_gram_loss.1} parent=1 // pred_check
      _
    $region3: #{skip_gram_loss.1} parent=1 // pred_check_branch
      %9 = sbr.rel (0) target = $region5
    $region4: #{skip_gram_loss.1} parent=1 // pred_region
      _
    $region5: #{skip_gram_loss.1} parent=1 // pred_fallthru
      _
    // Predicated region
    $region6: #{skip_gram_loss.1} parent=1 // pred_check
      _
    $region7: #{skip_gram_loss.1} parent=1 // pred_check_branch
      %11 = sbr.rel (0) target = $region9
    $region8: #{skip_gram_loss.1} parent=1 // pred_region
      _
    $region9: #{skip_gram_loss.1} parent=1 // pred_fallthru
      _
    %p12 = scmp.eq.s32.totalorder 0, 0
    // Predicated region
    $region10: #{skip_gram_loss.1} parent=1 // pred_check
      %p13 = pneg %p12
    $region11: #{skip_gram_loss.1} parent=1 // pred_check_branch
      %15 = sbr.rel (%p13) target = $region13
    $region12: #{skip_gram_loss.1} parent=1 // pred_region
      %s16 = scalar_lea.smem [#allocation2], 0
      %17 = sst [smem:[%s16]] 0.0
    $region13: #{skip_gram_loss.1} parent=1 // pred_fallthru
      _
    %v18 = vld [vmem:[%s0] sm:$0xff]
    %v19 = vld [vmem:[%s1] sm:$0x3f]
    %v20 = vld [vmem:[%s1 + $0x8] sm:$0x3f]
    %v21 = vld [vmem:[%s1 + $0x10] sm:$0x3f]
    %v22 = vld [vmem:[%s1 + $0x18] sm:$0x3f]
    %v23 = vld [vmem:[%s1 + $0x20] sm:$0x3f]
    %v24 = vld [vmem:[%s1 + $0x28] sm:$0x3f]
    %v25 = vld [vmem:[%s1 + $0x30] sm:$0x3f]
    %v26 = vld [vmem:[%s1 + $0x38] sm:$0x3f]
    %v28 = vcombine.high %v18, %v18
    %v30 = vunpack.c.l.s4 1966171168
    %v31 = vunpack.c.0.s8 %v30
    %v32 = vlaneseq
    %v33 = vshrl.u32 %v32, 7
    %v34 = vsub.s32 %v31, %v33
    %v35 = vrot.slane %v18, %v34
    %v37 = vunpack.c.l.s4 1966171168
    %v38 = vunpack.c.0.s8 %v37
    %v39 = vlaneseq
    %v40 = vshrl.u32 %v39, 7
    %v41 = vsub.s32 %v38, %v40
    %v42 = vrot.slane %v28, %v41
    %v43 = vcombine.high %v35, %v35
    %v44 = vcombine.high %v42, %v42
    %v46 = vunpack.c.l.s4 1966171168
    %v47 = vunpack.c.0.s8 %v46
    %v48 = vlaneseq
    %v49 = vshrl.u32 %v48, 7
    %v50 = vsub.s32 %v47, %v49
    %v51 = vrot.slane %v35, %v50
    %v53 = vunpack.c.l.s4 1966171168
    %v54 = vunpack.c.0.s8 %v53
    %v55 = vlaneseq
    %v56 = vshrl.u32 %v55, 7
    %v57 = vsub.s32 %v54, %v56
    %v58 = vrot.slane %v42, %v57
    %v60 = vunpack.c.l.s4 1966171168
    %v61 = vunpack.c.0.s8 %v60
    %v62 = vlaneseq
    %v63 = vshrl.u32 %v62, 7
    %v64 = vsub.s32 %v61, %v63
    %v65 = vrot.slane %v43, %v64
    %v67 = vunpack.c.l.s4 1966171168
    %v68 = vunpack.c.0.s8 %v67
    %v69 = vlaneseq
    %v70 = vshrl.u32 %v69, 7
    %v71 = vsub.s32 %v68, %v70
    %v72 = vrot.slane %v44, %v71
    %v73 = vcombine.high %v51, %v51
    %v74 = vcombine.high %v58, %v58
    %v75 = vcombine.high %v65, %v65
    %v76 = vcombine.high %v72, %v72
    %v77 = vlaneseq
    %v78 = vshrl.u32 %v77, 7
    %v79 = vsub.s32 0, %v78
    %v80 = vrot.slane %v51, %v79
    %v81 = vlaneseq
    %v82 = vshrl.u32 %v81, 7
    %v83 = vsub.s32 0, %v82
    %v84 = vrot.slane %v65, %v83
    %v85 = vlaneseq
    %v86 = vshrl.u32 %v85, 7
    %v87 = vsub.s32 0, %v86
    %v88 = vrot.slane %v73, %v87
    %v89 = vlaneseq
    %v90 = vshrl.u32 %v89, 7
    %v91 = vsub.s32 0, %v90
    %v92 = vrot.slane %v75, %v91
    %v93 = vlaneseq
    %v94 = vshrl.u32 %v93, 7
    %v95 = vsub.s32 0, %v94
    %v96 = vrot.slane %v58, %v95
    %v97 = vlaneseq
    %v98 = vshrl.u32 %v97, 7
    %v99 = vsub.s32 0, %v98
    %v100 = vrot.slane %v72, %v99
    %v101 = vlaneseq
    %v102 = vshrl.u32 %v101, 7
    %v103 = vsub.s32 0, %v102
    %v104 = vrot.slane %v74, %v103
    %v105 = vlaneseq
    %v106 = vshrl.u32 %v105, 7
    %v107 = vsub.s32 0, %v106
    %v108 = vrot.slane %v76, %v107
    %v117 = vmul.f32 %v80, %v19
    %v118 = vmul.f32 %v84, %v20
    %v119 = vmul.f32 %v88, %v21
    %v120 = vmul.f32 %v92, %v22
    %v121 = vmul.f32 %v96, %v23
    %v122 = vmul.f32 %v100, %v24
    %v123 = vmul.f32 %v104, %v25
    %v124 = vmul.f32 %v108, %v26
    %vm125 = vcmask 1045504
    %v126 = vsel %vm125, %v117, 0.0
    %127 = vadd.xlane.f32.xlu0 %v126
    %v128 = vpop.xlane.xlu0 %127
    %v129 = vsel %vm125, %v118, 0.0
    %130 = vadd.xlane.f32.xlu0 %v129
    %v131 = vpop.xlane.xlu0 %130
    %v132 = vsel %vm125, %v119, 0.0
    %133 = vadd.xlane.f32.xlu0 %v132
    %v134 = vpop.xlane.xlu0 %133
    %v135 = vsel %vm125, %v120, 0.0
    %136 = vadd.xlane.f32.xlu0 %v135
    %v137 = vpop.xlane.xlu0 %136
    %v138 = vsel %vm125, %v121, 0.0
    %139 = vadd.xlane.f32.xlu0 %v138
    %v140 = vpop.xlane.xlu0 %139
    %v141 = vsel %vm125, %v122, 0.0
    %142 = vadd.xlane.f32.xlu0 %v141
    %v143 = vpop.xlane.xlu0 %142
    %v144 = vsel %vm125, %v123, 0.0
    %145 = vadd.xlane.f32.xlu0 %v144
    %v146 = vpop.xlane.xlu0 %145
    %v147 = vsel %vm125, %v124, 0.0
    %148 = vadd.xlane.f32.xlu0 %v147
    %v149 = vpop.xlane.xlu0 %148
    %v150 = vlaneseq
    %v151 = vand.u32 %v150, 127
    %vm152 = vcmp.eq.s32.totalorder %v151, 0
    %v153 = vsub.f32 0.0, %v128
    %v154 = vsub.f32 0.0, %v131
    %v155 = vsub.f32 0.0, %v134
    %v156 = vsub.f32 0.0, %v137
    %v157 = vsub.f32 0.0, %v140
    %v158 = vsub.f32 0.0, %v143
    %v159 = vsub.f32 0.0, %v146
    %v160 = vsub.f32 0.0, %v149
    %v169 = vlaneseq
    %v170 = vshrl.u32 %v169, 7
    %v171 = vsub.s32 %v151, %v170
    %v172 = vrot.slane %v128, %v171
    %v173 = vlaneseq
    %v174 = vshrl.u32 %v173, 7
    %v175 = vsub.s32 %v151, %v174
    %v176 = vrot.slane %v131, %v175
    %v177 = vlaneseq
    %v178 = vshrl.u32 %v177, 7
    %v179 = vsub.s32 %v151, %v178
    %v180 = vrot.slane %v134, %v179
    %v181 = vlaneseq
    %v182 = vshrl.u32 %v181, 7
    %v183 = vsub.s32 %v151, %v182
    %v184 = vrot.slane %v137, %v183
    %v185 = vlaneseq
    %v186 = vshrl.u32 %v185, 7
    %v187 = vsub.s32 %v151, %v186
    %v188 = vrot.slane %v140, %v187
    %v189 = vlaneseq
    %v190 = vshrl.u32 %v189, 7
    %v191 = vsub.s32 %v151, %v190
    %v192 = vrot.slane %v143, %v191
    %v193 = vlaneseq
    %v194 = vshrl.u32 %v193, 7
    %v195 = vsub.s32 %v151, %v194
    %v196 = vrot.slane %v146, %v195
    %v197 = vlaneseq
    %v198 = vshrl.u32 %v197, 7
    %v199 = vsub.s32 %v151, %v198
    %v200 = vrot.slane %v149, %v199
    %vm201 = vcmask 1041409
    %v202 = vsel %vm201, %v176, %v172
    %vm203 = vcmask 1042434
    %v204 = vsel %vm203, %v180, %v202
    %vm205 = vcmask 1043459
    %v206 = vsel %vm205, %v184, %v204
    %vm207 = vcmask 1044484
    %v208 = vsel %vm207, %v188, %v206
    %vm209 = vcmask 1045509
    %v210 = vsel %vm209, %v192, %v208
    %vm211 = vcmask 1046534
    %v212 = vsel %vm211, %v196, %v210
    %vm213 = vcmask 1047559
    %v214 = vsel %vm213, %v200, %v212
    %v224 = vlaneseq
    %v225 = vshrl.u32 %v224, 7
    %v226 = vsub.s32 %v151, %v225
    %v227 = vrot.slane %v153, %v226
    %v228 = vlaneseq
    %v229 = vshrl.u32 %v228, 7
    %v230 = vsub.s32 %v151, %v229
    %v231 = vrot.slane %v154, %v230
    %v232 = vlaneseq
    %v233 = vshrl.u32 %v232, 7
    %v234 = vsub.s32 %v151, %v233
    %v235 = vrot.slane %v155, %v234
    %v236 = vlaneseq
    %v237 = vshrl.u32 %v236, 7
    %v238 = vsub.s32 %v151, %v237
    %v239 = vrot.slane %v156, %v238
    %v240 = vlaneseq
    %v241 = vshrl.u32 %v240, 7
    %v242 = vsub.s32 %v151, %v241
    %v243 = vrot.slane %v157, %v242
    %v244 = vlaneseq
    %v245 = vshrl.u32 %v244, 7
    %v246 = vsub.s32 %v151, %v245
    %v247 = vrot.slane %v158, %v246
    %v248 = vlaneseq
    %v249 = vshrl.u32 %v248, 7
    %v250 = vsub.s32 %v151, %v249
    %v251 = vrot.slane %v159, %v250
    %v252 = vlaneseq
    %v253 = vshrl.u32 %v252, 7
    %v254 = vsub.s32 %v151, %v253
    %v255 = vrot.slane %v160, %v254
    %v256 = vsel %vm201, %v231, %v227
    %v257 = vsel %vm203, %v235, %v256
    %v258 = vsel %vm205, %v239, %v257
    %v259 = vsel %vm207, %v243, %v258
    %v260 = vsel %vm209, %v247, %v259
    %v261 = vsel %vm211, %v251, %v260
    %v262 = vsel %vm213, %v255, %v261
    %v264 = vsel %vm152, %v214, %v262
    %v265 = vmin.f32 %v264, 0.0
    %v266 = vand.u32 2147483647, %v264
    %v267 = vsub.f32 0.0, %v266
    %v268 = vmul.f32 %v267, 1.442695
    %v269 = vpow.pop %v268
    %v270 = vadd.f32 %v269, 1.0
    %v271 = vlog2.pop %v270
    %v272 = vmul.f32 %v271, 0.6931472
    %v273 = vsub.f32 %v265, %v272
    %s274 = sld [smem:[#allocation2]]
    %vm275 = vcmask 48128
    %v276 = vsel %vm275, %v273, 0.0
    %277 = vadd.xlane.f32.xlu0 %v276
    %v278 = vpop.xlane.xlu0 %277
    %v279 = vrot.slane %v278, 4
    %v280 = vadd.f32 %v278, %v279
    %v281 = vrot.slane %v280, 2
    %v282 = vadd.f32 %v280, %v281
    %v283 = vrot.slane %v282, 1
    %v284 = vadd.f32 %v282, %v283
    %s285 = vtos %v284
    %s286 = sadd.f32 %s274, %s285
    %s287 = scalar_lea.smem [#allocation2], 0
    %288 = sst [smem:[%s287]] %s286
    // Predicated region
    $region14: #{skip_gram_loss.1} parent=1 // pred_check
      %p289 = pneg %p12
    $region15: #{skip_gram_loss.1} parent=1 // pred_check_branch
      %291 = sbr.rel (%p289) target = $region17
    $region16: #{skip_gram_loss.1} parent=1 // pred_region
      %s292 = sld [smem:[#allocation2]]
      %s293 = ssub.f32 0.0, %s292
      %s294 = smul.f32 %s293, 0.125
      %295 = sst [smem:[%s287]] %s294
    $region17: #{skip_gram_loss.1} parent=1 // pred_fallthru
      _
    // Predicated region
    $region18: #{skip_gram_loss.1} parent=1 // pred_check
      _
    $region19: #{skip_gram_loss.1} parent=1 // pred_check_branch
      %297 = sbr.rel (0) target = $region21
    $region20: #{skip_gram_loss.1} parent=1 // pred_region
      %s299 = ssub.s32 16, 16
      %300 = vsyncadd [#allocation3], %s299
      %303 = dma.smem_to_hbm [#allocation2], 16, %s2, [#allocation3]
    $region21: #{skip_gram_loss.1} parent=1 // pred_fallthru
      _
    // Predicated region
    $region22: #{skip_gram_loss.1} parent=1 // pred_check
      _
    $region23: #{skip_gram_loss.1} parent=1 // pred_check_branch
      %305 = sbr.rel (0) target = $region25
    $region24: #{skip_gram_loss.1} parent=1 // pred_region
      %306 = dma.done [#allocation3], 16
    $region25: #{skip_gram_loss.1} parent=1 // pred_fallthru
      _
    %307 = sfence
    %308 = vsyncpa [#allocation3], 1

</llo_original>
